<compile_context>
chip_gen: v6e
topology: v6e:2x2x1
jax: 0.10.0
libtpu: 0.0.40
codegen_flags: <defaults>
</compile_context>

<pallas_src>
import functools

import jax
import jax.numpy as jnp
from jax.experimental import pallas as pl
from jax.experimental.pallas import tpu as pltpu


def _dqn_kernel(xT_ref, w1_ref, b1_ref, w2_ref, b2_ref, oT_ref, *, num_obs, use_fma):
    """One batch tile: oT = W2 @ relu(W1 @ xT + b1) + b2.

    xT_ref : [num_obs, TB]         batch on lanes -> dense loads
    w1_ref : [hidden, num_obs]     PyTorch layout, resident across the grid
    b1_ref : [hidden, 1]
    w2_ref : [num_actions, hidden]
    b2_ref : [num_actions, 1]
    oT_ref : [num_actions, TB]     batch on lanes -> dense (unmasked) stores
    """
    xT = xT_ref[...].astype(jnp.float32)               # [num_obs, TB]
    w1 = w1_ref[...].astype(jnp.float32)               # [hidden, num_obs]

    if use_fma:
        # K = num_obs is tiny: rank-1 broadcast FMAs on the VPU (avoids a <3%-utilized
        # K=4 MXU contraction and keeps the MXU push slot free).
        h = w1[:, 0:1] * xT[0:1, :]                    # [hidden, TB]
        for k in range(1, num_obs):
            h = h + w1[:, k:k + 1] * xT[k:k + 1, :]
    else:
        h = jnp.dot(w1, xT, preferred_element_type=jnp.float32)

    h = h + b1_ref[...]                                # [hidden, 1] broadcasts over lanes
    h = jnp.maximum(h, 0.0)

    # Second layer: K = hidden = 128 -> MXU, f32 accumulation.
    q = jnp.dot(w2_ref[...].astype(jnp.float32), h,
                preferred_element_type=jnp.float32)    # [num_actions, TB]
    q = q + b2_ref[...]                                # [num_actions, 1] broadcasts over lanes
    oT_ref[...] = q.astype(oT_ref.dtype)


def dqn_forward(x, w1, b1, w2, b2, *, block_b=512):
    """Forward pass of DQNNetwork.

    x  : [batch, num_obs]
    w1 : [hidden, num_obs], b1 : [hidden]          (PyTorch nn.Linear layout)
    w2 : [num_actions, hidden], b2 : [num_actions]
    returns [batch, num_actions]
    """
    assert block_b % 128 == 0, "batch tile must be a multiple of 128 (lane width)"
    batch, num_obs = x.shape
    hidden = w1.shape[0]
    num_actions = w2.shape[0]

    # Put batch on the lane axis; biases become column vectors that broadcast over lanes.
    xT = x.T                                           # [num_obs, batch]
    b1c = b1.reshape(hidden, 1)
    b2c = b2.reshape(num_actions, 1)

    if batch <= block_b:
        tb = batch                                     # single tile == full dim (tiling rule ok)
        padded = batch
    else:
        tb = block_b
        padded = ((batch + tb - 1) // tb) * tb
        if padded != batch:                            # pad so every tile is full
            xT = jnp.pad(xT, ((0, 0), (0, padded - batch)))
    grid = (padded // tb,)

    kernel = functools.partial(_dqn_kernel, num_obs=num_obs, use_fma=num_obs <= 8)

    itemsize = jnp.dtype(x.dtype).itemsize
    cost = pl.CostEstimate(
        flops=2 * batch * hidden * (num_obs + num_actions),
        transcendentals=0,
        bytes_accessed=itemsize * (x.size + w1.size + b1.size + w2.size + b2.size
                                   + batch * num_actions),
    )

    qT = pl.pallas_call(
        kernel,
        out_shape=jax.ShapeDtypeStruct((num_actions, padded), x.dtype),
        grid=grid,
        in_specs=[
            pl.BlockSpec((num_obs, tb), lambda i: (0, i)),          # x^T: tiled over batch
            pl.BlockSpec((hidden, num_obs), lambda i: (0, 0)),      # W1: resident
            pl.BlockSpec((hidden, 1), lambda i: (0, 0)),            # b1: resident
            pl.BlockSpec((num_actions, hidden), lambda i: (0, 0)),  # W2: resident
            pl.BlockSpec((num_actions, 1), lambda i: (0, 0)),       # b2: resident
        ],
        out_specs=pl.BlockSpec((num_actions, tb), lambda i: (0, i)),
        compiler_params=pltpu.CompilerParams(
            dimension_semantics=("parallel",),        # batch tiles are independent
        ),
        cost_estimate=cost,
    )(xT, w1, b1c, w2, b2c)

    return qT[:, :batch].T                             # back to [batch, num_actions]


def init_params(key, num_obs, num_actions, hidden=128, dtype=jnp.float32):
    """PyTorch nn.Linear default init (U(-1/sqrt(fan_in), 1/sqrt(fan_in))), PyTorch layouts."""
    k1, k2, k3, k4 = jax.random.split(key, 4)
    bound1 = 1.0 / float(num_obs) ** 0.5
    bound2 = 1.0 / float(hidden) ** 0.5
    w1 = jax.random.uniform(k1, (hidden, num_obs), dtype, -bound1, bound1)
    b1 = jax.random.uniform(k2, (hidden,), dtype, -bound1, bound1)
    w2 = jax.random.uniform(k3, (num_actions, hidden), dtype, -bound2, bound2)
    b2 = jax.random.uniform(k4, (num_actions,), dtype, -bound2, bound2)
    return w1, b1, w2, b2


if __name__ == "__main__":
    key = jax.random.PRNGKey(0)
    batch, num_obs, num_actions, hidden = 8, 4, 2, 128

    kx, kp = jax.random.split(key)
    x = jax.random.normal(kx, (batch, num_obs), jnp.float32)
    w1, b1, w2, b2 = init_params(kp, num_obs, num_actions, hidden)

    out = jax.block_until_ready(dqn_forward(x, w1, b1, w2, b2))

    # Reference in plain JAX (same semantics as the PyTorch module: Linear -> ReLU -> Linear).
    ref = jnp.maximum(x @ w1.T + b1, 0.0) @ w2.T + b2
    assert out.shape == (batch, num_actions)
    assert jnp.allclose(out, ref, atol=1e-5, rtol=1e-5)

    print("KERNEL_OK")
</pallas_src>

<mosaic_0001>
module attributes {stable_mosaic.version = 11 : i64} {
  func.func @_dqn_kernel(%arg0: i32, %arg1: memref<4x8xf32, #tpu.memory_space<vmem>>, %arg2: memref<128x4xf32, #tpu.memory_space<vmem>>, %arg3: memref<128x1xf32, #tpu.memory_space<vmem>>, %arg4: memref<2x128xf32, #tpu.memory_space<vmem>>, %arg5: memref<2x1xf32, #tpu.memory_space<vmem>>, %arg6: memref<2x8xf32, #tpu.memory_space<vmem>>) attributes {dimension_semantics = [#tpu.dimension_semantics<parallel>], iteration_bounds = array<i64: 1>, scalar_prefetch = 0 : i64, scratch_operands = 0 : i64, tpu.core_type = #tpu.core_type<tc>, window_params = [{transform_indices = @transform_0, window_bounds = array<i64: 4, 8>}, {pipeline_mode = #tpu.pipeline_mode<synchronous>, transform_indices = @transform_1, window_bounds = array<i64: 128, 4>}, {pipeline_mode = #tpu.pipeline_mode<synchronous>, transform_indices = @transform_2, window_bounds = array<i64: 128, 1>}, {pipeline_mode = #tpu.pipeline_mode<synchronous>, transform_indices = @transform_3, window_bounds = array<i64: 2, 128>}, {pipeline_mode = #tpu.pipeline_mode<synchronous>, transform_indices = @transform_4, window_bounds = array<i64: 2, 1>}, {transform_indices = @transform_5, window_bounds = array<i64: 2, 8>}]} {
    %c0 = arith.constant 0 : index
    %c0_0 = arith.constant 0 : index
    %0 = vector.load %arg1[%c0, %c0_0] : memref<4x8xf32, #tpu.memory_space<vmem>>, vector<4x8xf32>
    %c0_1 = arith.constant 0 : index
    %c0_2 = arith.constant 0 : index
    %1 = vector.load %arg2[%c0_1, %c0_2] : memref<128x4xf32, #tpu.memory_space<vmem>>, vector<128x4xf32>
    %2 = vector.extract_strided_slice %1 {offsets = [0, 0], sizes = [128, 1], strides = [1, 1]} : vector<128x4xf32> to vector<128x1xf32>
    %3 = vector.extract_strided_slice %0 {offsets = [0, 0], sizes = [1, 8], strides = [1, 1]} : vector<4x8xf32> to vector<1x8xf32>
    %4 = vector.broadcast %2 : vector<128x1xf32> to vector<128x8xf32>
    %5 = vector.broadcast %3 : vector<1x8xf32> to vector<128x8xf32>
    %6 = arith.mulf %4, %5 : vector<128x8xf32>
    %7 = vector.extract_strided_slice %1 {offsets = [0, 1], sizes = [128, 1], strides = [1, 1]} : vector<128x4xf32> to vector<128x1xf32>
    %8 = vector.extract_strided_slice %0 {offsets = [1, 0], sizes = [1, 8], strides = [1, 1]} : vector<4x8xf32> to vector<1x8xf32>
    %9 = vector.broadcast %7 : vector<128x1xf32> to vector<128x8xf32>
    %10 = vector.broadcast %8 : vector<1x8xf32> to vector<128x8xf32>
    %11 = arith.mulf %9, %10 : vector<128x8xf32>
    %12 = arith.addf %6, %11 : vector<128x8xf32>
    %13 = vector.extract_strided_slice %1 {offsets = [0, 2], sizes = [128, 1], strides = [1, 1]} : vector<128x4xf32> to vector<128x1xf32>
    %14 = vector.extract_strided_slice %0 {offsets = [2, 0], sizes = [1, 8], strides = [1, 1]} : vector<4x8xf32> to vector<1x8xf32>
    %15 = vector.broadcast %13 : vector<128x1xf32> to vector<128x8xf32>
    %16 = vector.broadcast %14 : vector<1x8xf32> to vector<128x8xf32>
    %17 = arith.mulf %15, %16 : vector<128x8xf32>
    %18 = arith.addf %12, %17 : vector<128x8xf32>
    %19 = vector.extract_strided_slice %1 {offsets = [0, 3], sizes = [128, 1], strides = [1, 1]} : vector<128x4xf32> to vector<128x1xf32>
    %20 = vector.extract_strided_slice %0 {offsets = [3, 0], sizes = [1, 8], strides = [1, 1]} : vector<4x8xf32> to vector<1x8xf32>
    %21 = vector.broadcast %19 : vector<128x1xf32> to vector<128x8xf32>
    %22 = vector.broadcast %20 : vector<1x8xf32> to vector<128x8xf32>
    %23 = arith.mulf %21, %22 : vector<128x8xf32>
    %24 = arith.addf %18, %23 : vector<128x8xf32>
    %c0_3 = arith.constant 0 : index
    %c0_4 = arith.constant 0 : index
    %25 = vector.load %arg3[%c0_3, %c0_4] : memref<128x1xf32, #tpu.memory_space<vmem>>, vector<128x1xf32>
    %26 = vector.broadcast %25 : vector<128x1xf32> to vector<128x8xf32>
    %27 = arith.addf %24, %26 : vector<128x8xf32>
    %cst = arith.constant 0.000000e+00 : f32
    %28 = vector.broadcast %cst : f32 to vector<128x8xf32>
    %29 = arith.maximumf %27, %28 : vector<128x8xf32>
    %c0_5 = arith.constant 0 : index
    %c0_6 = arith.constant 0 : index
    %30 = vector.load %arg4[%c0_5, %c0_6] : memref<2x128xf32, #tpu.memory_space<vmem>>, vector<2x128xf32>
    %cst_7 = arith.constant dense<0.000000e+00> : vector<2x8xf32>
    %31 = tpu.matmul %30, %29, %cst_7 {dimension_numbers = #tpu.dot_dimension_numbers<[1], [0], [0], [1], [0, 0, 1, 1], [], []>} : vector<2x128xf32>, vector<128x8xf32>, vector<2x8xf32> -> vector<2x8xf32>
    %c0_8 = arith.constant 0 : index
    %c0_9 = arith.constant 0 : index
    %32 = vector.load %arg5[%c0_8, %c0_9] : memref<2x1xf32, #tpu.memory_space<vmem>>, vector<2x1xf32>
    %33 = vector.broadcast %32 : vector<2x1xf32> to vector<2x8xf32>
    %34 = arith.addf %31, %33 : vector<2x8xf32>
    %c0_10 = arith.constant 0 : index
    %c0_11 = arith.constant 0 : index
    %35 = vector.load %arg6[%c0_10, %c0_11] : memref<2x8xf32, #tpu.memory_space<vmem>>, vector<2x8xf32>
    tpu.vector_store %arg6[%c0_10, %c0_11], %34 {strides = array<i32>} : memref<2x8xf32, #tpu.memory_space<vmem>>, vector<2x8xf32>,
    return
  }
  func.func @transform_0(%arg0: i32) -> (i32, i32) {
    %c0_i32 = arith.constant 0 : i32
    %c0_i32_0 = arith.constant 0 : i32
    return %c0_i32, %arg0 : i32, i32
  }
  func.func @transform_1(%arg0: i32) -> (i32, i32) {
    %c0_i32 = arith.constant 0 : i32
    %c0_i32_0 = arith.constant 0 : i32
    %c0_i32_1 = arith.constant 0 : i32
    return %c0_i32, %c0_i32_0 : i32, i32
  }
  func.func @transform_2(%arg0: i32) -> (i32, i32) {
    %c0_i32 = arith.constant 0 : i32
    %c0_i32_0 = arith.constant 0 : i32
    %c0_i32_1 = arith.constant 0 : i32
    return %c0_i32, %c0_i32_0 : i32, i32
  }
  func.func @transform_3(%arg0: i32) -> (i32, i32) {
    %c0_i32 = arith.constant 0 : i32
    %c0_i32_0 = arith.constant 0 : i32
    %c0_i32_1 = arith.constant 0 : i32
    return %c0_i32, %c0_i32_0 : i32, i32
  }
  func.func @transform_4(%arg0: i32) -> (i32, i32) {
    %c0_i32 = arith.constant 0 : i32
    %c0_i32_0 = arith.constant 0 : i32
    %c0_i32_1 = arith.constant 0 : i32
    return %c0_i32, %c0_i32_0 : i32, i32
  }
  func.func @transform_5(%arg0: i32) -> (i32, i32) {
    %c0_i32 = arith.constant 0 : i32
    %c0_i32_0 = arith.constant 0 : i32
    return %c0_i32, %arg0 : i32, i32
  }
}

</mosaic_0001>

<llo_original>
// kernel: tpu_custom_call.1
$region0: #{tpu_custom_call.1}
  #allocation0 [shape = 'u32[]', space=smem, size = 0x4, offset = 0x4, fixed_abs, tag = 'smem constant byte address 0x4 - core index']
  #allocation1 [shape = 'u32[144,128]{1,0:T(1,128)}', space=vmem, size = 0x12000, scoped, tag = 'internal scratch']
  %s0 = inlined_call_operand.vmem [shape: f32[4,8], index: 0, kind: input, shape index: {}]
  %s1 = inlined_call_operand.vmem [shape: f32[128,4], index: 1, kind: input, shape index: {}]
  %s2 = inlined_call_operand.vmem [shape: f32[128,1], index: 2, kind: input, shape index: {}]
  %s3 = inlined_call_operand.vmem [shape: f32[2,128], index: 3, kind: input, shape index: {}]
  %s4 = inlined_call_operand.vmem [shape: f32[2,1], index: 4, kind: input, shape index: {}]
  %s5 = inlined_call_operand.hbm [shape: f32[2,8], index: 5, kind: output, shape index: {}]
  %s6 = sld [smem:[#allocation0]]
  $region30: #{tpu_custom_call.1} parent=0
    _
  %s8 = ssub.s32 1, %s6
  %s9 = scalar_select 0, %s8, %s6
  $region1: #{tpu_custom_call.1} parent=0
    #allocation2 [shape = 'u8[1024]{0}', space=vmem, size = 0x400, scoped, tag = 'output window, operand 0, single buffered']
    #allocation3 [shape = 's32[1]{0}', space=sflag, size = 0x4, scoped, tag = 'scoped memory for tpu_custom_call.1']
    %10 = vsyncpa [#allocation3], 0
    // Predicated region
    $region2: #{tpu_custom_call.1} parent=1 // pred_check
      _
    $region3: #{tpu_custom_call.1} parent=1 // pred_check_branch
      %12 = sbr.rel (0) target = $region5
    $region4: #{tpu_custom_call.1} parent=1 // pred_region
      _
    $region5: #{tpu_custom_call.1} parent=1 // pred_fallthru
      _
    // Predicated region
    $region6: #{tpu_custom_call.1} parent=1 // pred_check
      _
    $region7: #{tpu_custom_call.1} parent=1 // pred_check_branch
      %14 = sbr.rel (0) target = $region9
    $region8: #{tpu_custom_call.1} parent=1 // pred_region
      _
    $region9: #{tpu_custom_call.1} parent=1 // pred_fallthru
      _
    // Predicated region
    $region10: #{tpu_custom_call.1} parent=1 // pred_check
      _
    $region11: #{tpu_custom_call.1} parent=1 // pred_check_branch
      %16 = sbr.rel (0) target = $region13
    $region12: #{tpu_custom_call.1} parent=1 // pred_region
      _
    $region13: #{tpu_custom_call.1} parent=1 // pred_fallthru
      _
    // Predicated region
    $region14: #{tpu_custom_call.1} parent=1 // pred_check
      _
    $region15: #{tpu_custom_call.1} parent=1 // pred_check_branch
      %18 = sbr.rel (0) target = $region17
    $region16: #{tpu_custom_call.1} parent=1 // pred_region
      _
    $region17: #{tpu_custom_call.1} parent=1 // pred_fallthru
      _
    // Predicated region
    $region18: #{tpu_custom_call.1} parent=1 // pred_check
      _
    $region19: #{tpu_custom_call.1} parent=1 // pred_check_branch
      %20 = sbr.rel (0) target = $region21
    $region20: #{tpu_custom_call.1} parent=1 // pred_region
      _
    $region21: #{tpu_custom_call.1} parent=1 // pred_fallthru
      _
    %v21 = vld [vmem:[%s0] sm:$0xf]
    %v22 = vld [vmem:[%s1] sm:$0xff]
    %v23 = vld [vmem:[%s1 + $0x8] sm:$0xff]
    %v24 = vld [vmem:[%s1 + $0x10] sm:$0xff]
    %v25 = vld [vmem:[%s1 + $0x18] sm:$0xff]
    %v26 = vld [vmem:[%s1 + $0x20] sm:$0xff]
    %v27 = vld [vmem:[%s1 + $0x28] sm:$0xff]
    %v28 = vld [vmem:[%s1 + $0x30] sm:$0xff]
    %v29 = vld [vmem:[%s1 + $0x38] sm:$0xff]
    %v30 = vld [vmem:[%s1 + $0x40] sm:$0xff]
    %v31 = vld [vmem:[%s1 + $0x48] sm:$0xff]
    %v32 = vld [vmem:[%s1 + $0x50] sm:$0xff]
    %v33 = vld [vmem:[%s1 + $0x58] sm:$0xff]
    %v34 = vld [vmem:[%s1 + $0x60] sm:$0xff]
    %v35 = vld [vmem:[%s1 + $0x68] sm:$0xff]
    %v36 = vld [vmem:[%s1 + $0x70] sm:$0xff]
    %v37 = vld [vmem:[%s1 + $0x78] sm:$0xff]
    %39 = vset.pattern.permute.xlu0 0
    %40 = vperm.xlu0 %39, %v22
    %v41 = vpop.permute.xlu0 %40
    %44 = vset.pattern.permute.xlu0 0
    %45 = vperm.xlu0 %44, %v23
    %v46 = vpop.permute.xlu0 %45
    %49 = vset.pattern.permute.xlu0 0
    %50 = vperm.xlu0 %49, %v24
    %v51 = vpop.permute.xlu0 %50
    %54 = vset.pattern.permute.xlu0 0
    %55 = vperm.xlu0 %54, %v25
    %v56 = vpop.permute.xlu0 %55
    %59 = vset.pattern.permute.xlu0 0
    %60 = vperm.xlu0 %59, %v26
    %v61 = vpop.permute.xlu0 %60
    %64 = vset.pattern.permute.xlu0 0
    %65 = vperm.xlu0 %64, %v27
    %v66 = vpop.permute.xlu0 %65
    %69 = vset.pattern.permute.xlu0 0
    %70 = vperm.xlu0 %69, %v28
    %v71 = vpop.permute.xlu0 %70
    %74 = vset.pattern.permute.xlu0 0
    %75 = vperm.xlu0 %74, %v29
    %v76 = vpop.permute.xlu0 %75
    %79 = vset.pattern.permute.xlu0 0
    %80 = vperm.xlu0 %79, %v30
    %v81 = vpop.permute.xlu0 %80
    %84 = vset.pattern.permute.xlu0 0
    %85 = vperm.xlu0 %84, %v31
    %v86 = vpop.permute.xlu0 %85
    %89 = vset.pattern.permute.xlu0 0
    %90 = vperm.xlu0 %89, %v32
    %v91 = vpop.permute.xlu0 %90
    %94 = vset.pattern.permute.xlu0 0
    %95 = vperm.xlu0 %94, %v33
    %v96 = vpop.permute.xlu0 %95
    %99 = vset.pattern.permute.xlu0 0
    %100 = vperm.xlu0 %99, %v34
    %v101 = vpop.permute.xlu0 %100
    %104 = vset.pattern.permute.xlu0 0
    %105 = vperm.xlu0 %104, %v35
    %v106 = vpop.permute.xlu0 %105
    %109 = vset.pattern.permute.xlu0 0
    %110 = vperm.xlu0 %109, %v36
    %v111 = vpop.permute.xlu0 %110
    %114 = vset.pattern.permute.xlu0 0
    %115 = vperm.xlu0 %114, %v37
    %v116 = vpop.permute.xlu0 %115
    %v118 = vlaneseq
    %v119 = vshrl.u32 %v118, 7
    %v120 = vsub.s32 0, %v119
    %v121 = vrot.slane %v21, %v120
    %v122 = vmul.f32 %v41, %v121
    %v123 = vmul.f32 %v46, %v121
    %v124 = vmul.f32 %v51, %v121
    %v125 = vmul.f32 %v56, %v121
    %v126 = vmul.f32 %v61, %v121
    %v127 = vmul.f32 %v66, %v121
    %v128 = vmul.f32 %v71, %v121
    %v129 = vmul.f32 %v76, %v121
    %v130 = vmul.f32 %v81, %v121
    %v131 = vmul.f32 %v86, %v121
    %v132 = vmul.f32 %v91, %v121
    %v133 = vmul.f32 %v96, %v121
    %v134 = vmul.f32 %v101, %v121
    %v135 = vmul.f32 %v106, %v121
    %v136 = vmul.f32 %v111, %v121
    %v137 = vmul.f32 %v116, %v121
    %138 = vset.pattern.permute.xlu0 1
    %139 = vperm.xlu0 %138, %v22
    %v140 = vpop.permute.xlu0 %139
    %142 = vset.pattern.permute.xlu0 1
    %143 = vperm.xlu0 %142, %v23
    %v144 = vpop.permute.xlu0 %143
    %146 = vset.pattern.permute.xlu0 1
    %147 = vperm.xlu0 %146, %v24
    %v148 = vpop.permute.xlu0 %147
    %150 = vset.pattern.permute.xlu0 1
    %151 = vperm.xlu0 %150, %v25
    %v152 = vpop.permute.xlu0 %151
    %154 = vset.pattern.permute.xlu0 1
    %155 = vperm.xlu0 %154, %v26
    %v156 = vpop.permute.xlu0 %155
    %158 = vset.pattern.permute.xlu0 1
    %159 = vperm.xlu0 %158, %v27
    %v160 = vpop.permute.xlu0 %159
    %162 = vset.pattern.permute.xlu0 1
    %163 = vperm.xlu0 %162, %v28
    %v164 = vpop.permute.xlu0 %163
    %166 = vset.pattern.permute.xlu0 1
    %167 = vperm.xlu0 %166, %v29
    %v168 = vpop.permute.xlu0 %167
    %170 = vset.pattern.permute.xlu0 1
    %171 = vperm.xlu0 %170, %v30
    %v172 = vpop.permute.xlu0 %171
    %174 = vset.pattern.permute.xlu0 1
    %175 = vperm.xlu0 %174, %v31
    %v176 = vpop.permute.xlu0 %175
    %178 = vset.pattern.permute.xlu0 1
    %179 = vperm.xlu0 %178, %v32
    %v180 = vpop.permute.xlu0 %179
    %182 = vset.pattern.permute.xlu0 1
    %183 = vperm.xlu0 %182, %v33
    %v184 = vpop.permute.xlu0 %183
    %186 = vset.pattern.permute.xlu0 1
    %187 = vperm.xlu0 %186, %v34
    %v188 = vpop.permute.xlu0 %187
    %190 = vset.pattern.permute.xlu0 1
    %191 = vperm.xlu0 %190, %v35
    %v192 = vpop.permute.xlu0 %191
    %194 = vset.pattern.permute.xlu0 1
    %195 = vperm.xlu0 %194, %v36
    %v196 = vpop.permute.xlu0 %195
    %198 = vset.pattern.permute.xlu0 1
    %199 = vperm.xlu0 %198, %v37
    %v200 = vpop.permute.xlu0 %199
    %v202 = vlaneseq
    %v203 = vshrl.u32 %v202, 7
    %v204 = vsub.s32 1, %v203
    %v205 = vrot.slane %v21, %v204
    %v206 = vmul.f32 %v140, %v205
    %v207 = vmul.f32 %v144, %v205
    %v208 = vmul.f32 %v148, %v205
    %v209 = vmul.f32 %v152, %v205
    %v210 = vmul.f32 %v156, %v205
    %v211 = vmul.f32 %v160, %v205
    %v212 = vmul.f32 %v164, %v205
    %v213 = vmul.f32 %v168, %v205
    %v214 = vmul.f32 %v172, %v205
    %v215 = vmul.f32 %v176, %v205
    %v216 = vmul.f32 %v180, %v205
    %v217 = vmul.f32 %v184, %v205
    %v218 = vmul.f32 %v188, %v205
    %v219 = vmul.f32 %v192, %v205
    %v220 = vmul.f32 %v196, %v205
    %v221 = vmul.f32 %v200, %v205
    %v222 = vadd.f32 %v122, %v206
    %v223 = vadd.f32 %v123, %v207
    %v224 = vadd.f32 %v124, %v208
    %v225 = vadd.f32 %v125, %v209
    %v226 = vadd.f32 %v126, %v210
    %v227 = vadd.f32 %v127, %v211
    %v228 = vadd.f32 %v128, %v212
    %v229 = vadd.f32 %v129, %v213
    %v230 = vadd.f32 %v130, %v214
    %v231 = vadd.f32 %v131, %v215
    %v232 = vadd.f32 %v132, %v216
    %v233 = vadd.f32 %v133, %v217
    %v234 = vadd.f32 %v134, %v218
    %v235 = vadd.f32 %v135, %v219
    %v236 = vadd.f32 %v136, %v220
    %v237 = vadd.f32 %v137, %v221
    %238 = vset.pattern.permute.xlu0 2
    %239 = vperm.xlu0 %238, %v22
    %v240 = vpop.permute.xlu0 %239
    %242 = vset.pattern.permute.xlu0 2
    %243 = vperm.xlu0 %242, %v23
    %v244 = vpop.permute.xlu0 %243
    %246 = vset.pattern.permute.xlu0 2
    %247 = vperm.xlu0 %246, %v24
    %v248 = vpop.permute.xlu0 %247
    %250 = vset.pattern.permute.xlu0 2
    %251 = vperm.xlu0 %250, %v25
    %v252 = vpop.permute.xlu0 %251
    %254 = vset.pattern.permute.xlu0 2
    %255 = vperm.xlu0 %254, %v26
    %v256 = vpop.permute.xlu0 %255
    %258 = vset.pattern.permute.xlu0 2
    %259 = vperm.xlu0 %258, %v27
    %v260 = vpop.permute.xlu0 %259
    %262 = vset.pattern.permute.xlu0 2
    %263 = vperm.xlu0 %262, %v28
    %v264 = vpop.permute.xlu0 %263
    %266 = vset.pattern.permute.xlu0 2
    %267 = vperm.xlu0 %266, %v29
    %v268 = vpop.permute.xlu0 %267
    %270 = vset.pattern.permute.xlu0 2
    %271 = vperm.xlu0 %270, %v30
    %v272 = vpop.permute.xlu0 %271
    %274 = vset.pattern.permute.xlu0 2
    %275 = vperm.xlu0 %274, %v31
    %v276 = vpop.permute.xlu0 %275
    %278 = vset.pattern.permute.xlu0 2
    %279 = vperm.xlu0 %278, %v32
    %v280 = vpop.permute.xlu0 %279
    %282 = vset.pattern.permute.xlu0 2
    %283 = vperm.xlu0 %282, %v33
    %v284 = vpop.permute.xlu0 %283
    %286 = vset.pattern.permute.xlu0 2
    %287 = vperm.xlu0 %286, %v34
    %v288 = vpop.permute.xlu0 %287
    %290 = vset.pattern.permute.xlu0 2
    %291 = vperm.xlu0 %290, %v35
    %v292 = vpop.permute.xlu0 %291
    %294 = vset.pattern.permute.xlu0 2
    %295 = vperm.xlu0 %294, %v36
    %v296 = vpop.permute.xlu0 %295
    %298 = vset.pattern.permute.xlu0 2
    %299 = vperm.xlu0 %298, %v37
    %v300 = vpop.permute.xlu0 %299
    %v302 = vlaneseq
    %v303 = vshrl.u32 %v302, 7
    %v304 = vsub.s32 2, %v303
    %v305 = vrot.slane %v21, %v304
    %v306 = vmul.f32 %v240, %v305
    %v307 = vmul.f32 %v244, %v305
    %v308 = vmul.f32 %v248, %v305
    %v309 = vmul.f32 %v252, %v305
    %v310 = vmul.f32 %v256, %v305
    %v311 = vmul.f32 %v260, %v305
    %v312 = vmul.f32 %v264, %v305
    %v313 = vmul.f32 %v268, %v305
    %v314 = vmul.f32 %v272, %v305
    %v315 = vmul.f32 %v276, %v305
    %v316 = vmul.f32 %v280, %v305
    %v317 = vmul.f32 %v284, %v305
    %v318 = vmul.f32 %v288, %v305
    %v319 = vmul.f32 %v292, %v305
    %v320 = vmul.f32 %v296, %v305
    %v321 = vmul.f32 %v300, %v305
    %v322 = vadd.f32 %v222, %v306
    %v323 = vadd.f32 %v223, %v307
    %v324 = vadd.f32 %v224, %v308
    %v325 = vadd.f32 %v225, %v309
    %v326 = vadd.f32 %v226, %v310
    %v327 = vadd.f32 %v227, %v311
    %v328 = vadd.f32 %v228, %v312
    %v329 = vadd.f32 %v229, %v313
    %v330 = vadd.f32 %v230, %v314
    %v331 = vadd.f32 %v231, %v315
    %v332 = vadd.f32 %v232, %v316
    %v333 = vadd.f32 %v233, %v317
    %v334 = vadd.f32 %v234, %v318
    %v335 = vadd.f32 %v235, %v319
    %v336 = vadd.f32 %v236, %v320
    %v337 = vadd.f32 %v237, %v321
    %338 = vset.pattern.permute.xlu0 3
    %339 = vperm.xlu0 %338, %v22
    %v340 = vpop.permute.xlu0 %339
    %342 = vset.pattern.permute.xlu0 3
    %343 = vperm.xlu0 %342, %v23
    %v344 = vpop.permute.xlu0 %343
    %346 = vset.pattern.permute.xlu0 3
    %347 = vperm.xlu0 %346, %v24
    %v348 = vpop.permute.xlu0 %347
    %350 = vset.pattern.permute.xlu0 3
    %351 = vperm.xlu0 %350, %v25
    %v352 = vpop.permute.xlu0 %351
    %354 = vset.pattern.permute.xlu0 3
    %355 = vperm.xlu0 %354, %v26
    %v356 = vpop.permute.xlu0 %355
    %358 = vset.pattern.permute.xlu0 3
    %359 = vperm.xlu0 %358, %v27
    %v360 = vpop.permute.xlu0 %359
    %362 = vset.pattern.permute.xlu0 3
    %363 = vperm.xlu0 %362, %v28
    %v364 = vpop.permute.xlu0 %363
    %366 = vset.pattern.permute.xlu0 3
    %367 = vperm.xlu0 %366, %v29
    %v368 = vpop.permute.xlu0 %367
    %370 = vset.pattern.permute.xlu0 3
    %371 = vperm.xlu0 %370, %v30
    %v372 = vpop.permute.xlu0 %371
    %374 = vset.pattern.permute.xlu0 3
    %375 = vperm.xlu0 %374, %v31
    %v376 = vpop.permute.xlu0 %375
    %378 = vset.pattern.permute.xlu0 3
    %379 = vperm.xlu0 %378, %v32
    %v380 = vpop.permute.xlu0 %379
    %382 = vset.pattern.permute.xlu0 3
    %383 = vperm.xlu0 %382, %v33
    %v384 = vpop.permute.xlu0 %383
    %386 = vset.pattern.permute.xlu0 3
    %387 = vperm.xlu0 %386, %v34
    %v388 = vpop.permute.xlu0 %387
    %390 = vset.pattern.permute.xlu0 3
    %391 = vperm.xlu0 %390, %v35
    %v392 = vpop.permute.xlu0 %391
    %394 = vset.pattern.permute.xlu0 3
    %395 = vperm.xlu0 %394, %v36
    %v396 = vpop.permute.xlu0 %395
    %398 = vset.pattern.permute.xlu0 3
    %399 = vperm.xlu0 %398, %v37
    %v400 = vpop.permute.xlu0 %399
    %v402 = vlaneseq
    %v403 = vshrl.u32 %v402, 7
    %v404 = vsub.s32 3, %v403
    %v405 = vrot.slane %v21, %v404
    %v406 = vmul.f32 %v340, %v405
    %v407 = vmul.f32 %v344, %v405
    %v408 = vmul.f32 %v348, %v405
    %v409 = vmul.f32 %v352, %v405
    %v410 = vmul.f32 %v356, %v405
    %v411 = vmul.f32 %v360, %v405
    %v412 = vmul.f32 %v364, %v405
    %v413 = vmul.f32 %v368, %v405
    %v414 = vmul.f32 %v372, %v405
    %v415 = vmul.f32 %v376, %v405
    %v416 = vmul.f32 %v380, %v405
    %v417 = vmul.f32 %v384, %v405
    %v418 = vmul.f32 %v388, %v405
    %v419 = vmul.f32 %v392, %v405
    %v420 = vmul.f32 %v396, %v405
    %v421 = vmul.f32 %v400, %v405
    %v422 = vadd.f32 %v322, %v406
    %v423 = vadd.f32 %v323, %v407
    %v424 = vadd.f32 %v324, %v408
    %v425 = vadd.f32 %v325, %v409
    %v426 = vadd.f32 %v326, %v410
    %v427 = vadd.f32 %v327, %v411
    %v428 = vadd.f32 %v328, %v412
    %v429 = vadd.f32 %v329, %v413
    %v430 = vadd.f32 %v330, %v414
    %v431 = vadd.f32 %v331, %v415
    %v432 = vadd.f32 %v332, %v416
    %v433 = vadd.f32 %v333, %v417
    %v434 = vadd.f32 %v334, %v418
    %v435 = vadd.f32 %v335, %v419
    %v436 = vadd.f32 %v336, %v420
    %v437 = vadd.f32 %v337, %v421
    %v438 = vld [vmem:[%s2] sm:$0xff]
    %v439 = vld [vmem:[%s2 + $0x8] sm:$0xff]
    %v440 = vld [vmem:[%s2 + $0x10] sm:$0xff]
    %v441 = vld [vmem:[%s2 + $0x18] sm:$0xff]
    %v442 = vld [vmem:[%s2 + $0x20] sm:$0xff]
    %v443 = vld [vmem:[%s2 + $0x28] sm:$0xff]
    %v444 = vld [vmem:[%s2 + $0x30] sm:$0xff]
    %v445 = vld [vmem:[%s2 + $0x38] sm:$0xff]
    %v446 = vld [vmem:[%s2 + $0x40] sm:$0xff]
    %v447 = vld [vmem:[%s2 + $0x48] sm:$0xff]
    %v448 = vld [vmem:[%s2 + $0x50] sm:$0xff]
    %v449 = vld [vmem:[%s2 + $0x58] sm:$0xff]
    %v450 = vld [vmem:[%s2 + $0x60] sm:$0xff]
    %v451 = vld [vmem:[%s2 + $0x68] sm:$0xff]
    %v452 = vld [vmem:[%s2 + $0x70] sm:$0xff]
    %v453 = vld [vmem:[%s2 + $0x78] sm:$0xff]
    %455 = vset.pattern.permute.xlu0 0
    %456 = vperm.xlu0 %455, %v438
    %v457 = vpop.permute.xlu0 %456
    %460 = vset.pattern.permute.xlu0 0
    %461 = vperm.xlu0 %460, %v439
    %v462 = vpop.permute.xlu0 %461
    %465 = vset.pattern.permute.xlu0 0
    %466 = vperm.xlu0 %465, %v440
    %v467 = vpop.permute.xlu0 %466
    %470 = vset.pattern.permute.xlu0 0
    %471 = vperm.xlu0 %470, %v441
    %v472 = vpop.permute.xlu0 %471
    %475 = vset.pattern.permute.xlu0 0
    %476 = vperm.xlu0 %475, %v442
    %v477 = vpop.permute.xlu0 %476
    %480 = vset.pattern.permute.xlu0 0
    %481 = vperm.xlu0 %480, %v443
    %v482 = vpop.permute.xlu0 %481
    %485 = vset.pattern.permute.xlu0 0
    %486 = vperm.xlu0 %485, %v444
    %v487 = vpop.permute.xlu0 %486
    %490 = vset.pattern.permute.xlu0 0
    %491 = vperm.xlu0 %490, %v445
    %v492 = vpop.permute.xlu0 %491
    %495 = vset.pattern.permute.xlu0 0
    %496 = vperm.xlu0 %495, %v446
    %v497 = vpop.permute.xlu0 %496
    %500 = vset.pattern.permute.xlu0 0
    %501 = vperm.xlu0 %500, %v447
    %v502 = vpop.permute.xlu0 %501
    %505 = vset.pattern.permute.xlu0 0
    %506 = vperm.xlu0 %505, %v448
    %v507 = vpop.permute.xlu0 %506
    %510 = vset.pattern.permute.xlu0 0
    %511 = vperm.xlu0 %510, %v449
    %v512 = vpop.permute.xlu0 %511
    %515 = vset.pattern.permute.xlu0 0
    %516 = vperm.xlu0 %515, %v450
    %v517 = vpop.permute.xlu0 %516
    %520 = vset.pattern.permute.xlu0 0
    %521 = vperm.xlu0 %520, %v451
    %v522 = vpop.permute.xlu0 %521
    %525 = vset.pattern.permute.xlu0 0
    %526 = vperm.xlu0 %525, %v452
    %v527 = vpop.permute.xlu0 %526
    %530 = vset.pattern.permute.xlu0 0
    %531 = vperm.xlu0 %530, %v453
    %v532 = vpop.permute.xlu0 %531
    %v534 = vadd.f32 %v422, %v457
    %v535 = vadd.f32 %v423, %v462
    %v536 = vadd.f32 %v424, %v467
    %v537 = vadd.f32 %v425, %v472
    %v538 = vadd.f32 %v426, %v477
    %v539 = vadd.f32 %v427, %v482
    %v540 = vadd.f32 %v428, %v487
    %v541 = vadd.f32 %v429, %v492
    %v542 = vadd.f32 %v430, %v497
    %v543 = vadd.f32 %v431, %v502
    %v544 = vadd.f32 %v432, %v507
    %v545 = vadd.f32 %v433, %v512
    %v546 = vadd.f32 %v434, %v517
    %v547 = vadd.f32 %v435, %v522
    %v548 = vadd.f32 %v436, %v527
    %v549 = vadd.f32 %v437, %v532
    %v550 = vmax.f32 %v534, 0.0
    %v551 = vmax.f32 %v535, 0.0
    %v552 = vmax.f32 %v536, 0.0
    %v553 = vmax.f32 %v537, 0.0
    %v554 = vmax.f32 %v538, 0.0
    %v555 = vmax.f32 %v539, 0.0
    %v556 = vmax.f32 %v540, 0.0
    %v557 = vmax.f32 %v541, 0.0
    %v558 = vmax.f32 %v542, 0.0
    %v559 = vmax.f32 %v543, 0.0
    %v560 = vmax.f32 %v544, 0.0
    %v561 = vmax.f32 %v545, 0.0
    %v562 = vmax.f32 %v546, 0.0
    %v563 = vmax.f32 %v547, 0.0
    %v564 = vmax.f32 %v548, 0.0
    %v565 = vmax.f32 %v549, 0.0
    %v566 = vld [vmem:[%s3] sm:$0x3]
    %v567 = vld [vmem:[%s4] sm:$0x3]
    %569 = vset.pattern.permute.xlu0 0
    %570 = vperm.xlu0 %569, %v567
    %v571 = vpop.permute.xlu0 %570
    %573 = vmatprep.subr.mxu0 0.0
    %574 = vmatpush1.msra.mxu0 %v565
    %575 = vmatprep.subr.mxu0 0.0
    %576 = vmatpush1.msra.mxu0 %v564
    %577 = vmatprep.subr.mxu0 0.0
    %578 = vmatpush1.msra.mxu0 %v563
    %579 = vmatprep.subr.mxu0 0.0
    %580 = vmatpush1.msra.mxu0 %v562
    %581 = vmatprep.subr.mxu0 0.0
    %582 = vmatpush1.msra.mxu0 %v561
    %583 = vmatprep.subr.mxu0 0.0
    %584 = vmatpush1.msra.mxu0 %v560
    %585 = vmatprep.subr.mxu0 0.0
    %586 = vmatpush1.msra.mxu0 %v559
    %587 = vmatprep.subr.mxu0 0.0
    %588 = vmatpush1.msra.mxu0 %v558
    %589 = vmatprep.subr.mxu0 0.0
    %590 = vmatpush1.msra.mxu0 %v557
    %591 = vmatprep.subr.mxu0 0.0
    %592 = vmatpush1.msra.mxu0 %v556
    %593 = vmatprep.subr.mxu0 0.0
    %594 = vmatpush1.msra.mxu0 %v555
    %595 = vmatprep.subr.mxu0 0.0
    %596 = vmatpush1.msra.mxu0 %v554
    %597 = vmatprep.subr.mxu0 0.0
    %598 = vmatpush1.msra.mxu0 %v553
    %599 = vmatprep.subr.mxu0 0.0
    %600 = vmatpush1.msra.mxu0 %v552
    %601 = vmatprep.subr.mxu0 0.0
    %602 = vmatpush1.msra.mxu0 %v551
    %603 = vmatprep.subr.mxu0 0.0
    %604 = vmatpush1.msra.mxu0 %v550
    %605 = vmatprep.subr.mxu0 0.0
    %606 = vmatpush2.msra.mxu0 0.0
    %607 = vmatprep.subr.mxu0 0.0
    %608 = vmatpush2.msra.mxu0 0.0
    %609 = vmatprep.subr.mxu0 0.0
    %610 = vmatpush2.msra.mxu0 0.0
    %611 = vmatprep.subr.mxu0 0.0
    %612 = vmatpush2.msra.mxu0 0.0
    %613 = vmatprep.subr.mxu0 0.0
    %614 = vmatpush2.msra.mxu0 0.0
    %615 = vmatprep.subr.mxu0 0.0
    %616 = vmatpush2.msra.mxu0 0.0
    %617 = vmatprep.subr.mxu0 0.0
    %618 = vmatpush2.msra.mxu0 0.0
    %619 = vmatprep.subr.mxu0 0.0
    %620 = vmatpush2.msra.mxu0 0.0
    %621 = vmatprep.subr.mxu0 0.0
    %622 = vmatpush2.msra.mxu0 0.0
    %623 = vmatprep.subr.mxu0 0.0
    %624 = vmatpush2.msra.mxu0 0.0
    %625 = vmatprep.subr.mxu0 0.0
    %626 = vmatpush2.msra.mxu0 0.0
    %627 = vmatprep.subr.mxu0 0.0
    %628 = vmatpush2.msra.mxu0 0.0
    %629 = vmatprep.subr.mxu0 0.0
    %630 = vmatpush2.msra.mxu0 0.0
    %631 = vmatprep.subr.mxu0 0.0
    %632 = vmatpush2.msra.mxu0 0.0
    %633 = vmatprep.subr.mxu0 0.0
    %634 = vmatpush2.msra.mxu0 0.0
    %635 = vmatprep.subr.mxu0 0.0
    %636 = vmatpush2.msra.mxu0 0.0
    %637 = vmatprep.mubr.f32.mxu0 0.0
    %638 = vmatmul.mubr.f32.gmra.mxu0 %v566
    %v639 = vpop.f32.mrf.mxu0
    %v640 = vadd.f32 %v571, %v639
    %v641 = vpop.f32.mrf.mxu0
    %642 = vdwg.mxu0
    %vm643 = vcmask 58368
    %644 = vst.msk [vmem:[#allocation2] sm:$0x3] %vm643, %v640
    // Predicated region
    $region22: #{tpu_custom_call.1} parent=1 // pred_check
      _
    $region23: #{tpu_custom_call.1} parent=1 // pred_check_branch
      %646 = sbr.rel (0) target = $region25
    $region24: #{tpu_custom_call.1} parent=1 // pred_region
      %s648 = ssub.s32 32, 32
      %649 = vsyncadd [#allocation3], %s648
      %s651 = sshll.u32 [#allocation2], 4
      %s652 = int_to_ptr.vmem [resolvable:$true] %s651
      %654 = dma.vmem_to_hbm [thread:$0]  %s652, 32, %s5, [#allocation3]
    $region25: #{tpu_custom_call.1} parent=1 // pred_fallthru
      _
    // Predicated region
    $region26: #{tpu_custom_call.1} parent=1 // pred_check
      _
    $region27: #{tpu_custom_call.1} parent=1 // pred_check_branch
      %656 = sbr.rel (0) target = $region29
    $region28: #{tpu_custom_call.1} parent=1 // pred_region
      %657 = dma.done [#allocation3], 32
    $region29: #{tpu_custom_call.1} parent=1 // pred_fallthru
      _
    %658 = vsyncpa [#allocation3], 1

</llo_original>
